<compile_context>
chip_gen: v7x
topology: tpu7x:2x2x1
jax: 0.10.0
libtpu: 0.0.40
codegen_flags: <defaults>
</compile_context>

<pallas_src>
import jax
import jax.numpy as jnp
from jax.experimental import pallas as pl
from jax.experimental.pallas import tpu as pltpu


def _modrelu_kernel(re_ref, im_ref, b_ref, out_re_ref, out_im_ref):
    # Blocks: re/im/out_* are (tile_b, C); b is (1, C) with m already folded in.
    re = re_ref[...]
    im = im_ref[...]
    b = b_ref[...]

    magnitude = jnp.sqrt(re * re + im * im)
    inv_denom = 1.0 / (magnitude + 1e-5)              # exact; kernel is mem-bound
    activated = jnp.maximum(magnitude + b, 0.0)       # relu(|z| + m*b)
    scale = activated * inv_denom

    # magnitude == 0 => re = im = 0 => outputs are exactly 0 (finite scale),
    # so the PyTorch `output[magnitude == 0] = 0` masking is already satisfied.
    out_re_ref[...] = scale * re
    out_im_ref[...] = scale * im


def modrelu_pallas(z_re, z_im, b, m=1.0):
    """Apply ModReLU to a complex tensor given as (real, imag) float32 arrays.

    z_re, z_im : (B, C) arrays (cast to float32)
    b          : scalar or (C,) bias (ModReLU's learnable parameter)
    Returns (out_re, out_im), each (B, C) float32.
    """
    assert z_re.shape == z_im.shape and z_re.ndim == 2
    B, C = z_re.shape
    z_re = z_re.astype(jnp.float32)
    z_im = z_im.astype(jnp.float32)

    # Fold m into the bias once, in the wrapper (handles both the scalar-bias
    # num_channels == 1 case and the (C,) case).
    b_arr = jnp.broadcast_to(jnp.asarray(b, jnp.float32).reshape(-1), (C,))
    b2d = (jnp.float32(m) * b_arr).reshape(1, C)

    # ---- per-generation VMEM budget ------------------------------------------
    try:
        vmem_cap = int(pltpu.get_tpu_info().vmem_capacity_bytes)
    except Exception:  # no live TPU info (e.g. interpret mode) -> conservative
        vmem_cap = 64 << 20
    # Target double-buffered data footprint: 3/8 of physical VMEM
    #   v5e/v6e (128 MiB) -> 48 MiB ; v7x (64 MiB) -> 24 MiB.
    footprint_budget = (vmem_cap * 3) // 8
    # footprint ~= 2 bufs * (2 inputs + 2 outputs) * tile_b * C * 4 B = 32*tile_b*C
    rows_by_vmem = max(8, footprint_budget // (32 * C))
    tile_b = (rows_by_vmem // 8) * 8                  # sublane-aligned, no 2048 cap
    b_ceil = -(-B // 8) * 8                           # round batch up to sublane
    tile_b = max(8, min(tile_b, b_ceil))
    grid = (pl.cdiv(B, tile_b),)                      # ragged last tile is masked

    data_spec = pl.BlockSpec((tile_b, C), lambda i: (i, 0))
    bias_spec = pl.BlockSpec((1, C), lambda i: (0, 0))

    vmem_limit = int(min(vmem_cap // 2, footprint_budget + (8 << 20)))

    out_re, out_im = pl.pallas_call(
        _modrelu_kernel,
        out_shape=(
            jax.ShapeDtypeStruct((B, C), jnp.float32),
            jax.ShapeDtypeStruct((B, C), jnp.float32),
        ),
        grid_spec=pltpu.PrefetchScalarGridSpec(
            num_scalar_prefetch=0,
            grid=grid,
            in_specs=[data_spec, data_spec, bias_spec],
            out_specs=[data_spec, data_spec],
        ),
        compiler_params=pltpu.CompilerParams(
            dimension_semantics=("parallel",),   # lets v7x shard steps across 2 TCs
            vmem_limit_bytes=vmem_limit,
        ),
    )(z_re, z_im, b2d)

    return out_re, out_im


def modrelu_reference(z_re, z_im, b, m=1.0):
    """Plain-JAX reference mirroring the PyTorch forward."""
    z = z_re + 1j * z_im
    magnitude = jnp.abs(z)
    phase = z / (magnitude + 1e-5)
    activated = jnp.maximum(magnitude + m * jnp.asarray(b).reshape(1, -1), 0.0)
    out = activated * phase
    out = jnp.where(magnitude == 0, 0.0 + 0.0j, out)
    return jnp.real(out).astype(jnp.float32), jnp.imag(out).astype(jnp.float32)


if __name__ == "__main__":
    B, C = 16, 128          # batch, num_channels (num_channels > 1 branch)
    m = 1.0
    init_bias = -0.05       # torch.full((C,), init_bias)

    key = jax.random.PRNGKey(0)
    k_re, k_im = jax.random.split(key)
    z_re = jax.random.normal(k_re, (B, C), dtype=jnp.float32)
    z_im = jax.random.normal(k_im, (B, C), dtype=jnp.float32)
    # Force a few exact zeros to exercise the magnitude == 0 behaviour.
    z_re = z_re.at[0, :4].set(0.0)
    z_im = z_im.at[0, :4].set(0.0)

    b = jnp.full((C,), init_bias, dtype=jnp.float32)

    out_re, out_im = modrelu_pallas(z_re, z_im, b, m=m)
    out_re = jax.block_until_ready(out_re)
    out_im = jax.block_until_ready(out_im)

    ref_re, ref_im = modrelu_reference(z_re, z_im, b, m=m)
    # Exact divide in the kernel -> tight tolerances are safe.
    assert jnp.allclose(out_re, ref_re, atol=1e-4, rtol=1e-4), "real part mismatch"
    assert jnp.allclose(out_im, ref_im, atol=1e-4, rtol=1e-4), "imag part mismatch"
    # Zero-magnitude inputs must map to exactly zero outputs.
    assert jnp.all(out_re[0, :4] == 0.0) and jnp.all(out_im[0, :4] == 0.0)

    print("KERNEL_OK")
</pallas_src>

<mosaic_0001>
module attributes {stable_mosaic.version = 11 : i64} {
  func.func @_modrelu_kernel(%arg0: i32, %arg1: memref<16x128xf32, #tpu.memory_space<vmem>>, %arg2: memref<16x128xf32, #tpu.memory_space<vmem>>, %arg3: memref<1x128xf32, #tpu.memory_space<vmem>>, %arg4: memref<16x128xf32, #tpu.memory_space<vmem>>, %arg5: memref<16x128xf32, #tpu.memory_space<vmem>>) attributes {dimension_semantics = [#tpu.dimension_semantics<parallel>], iteration_bounds = array<i64: 1>, scalar_prefetch = 0 : i64, scratch_operands = 0 : i64, tpu.core_type = #tpu.core_type<tc>, window_params = [{transform_indices = @transform_0, window_bounds = array<i64: 16, 128>}, {transform_indices = @transform_1, window_bounds = array<i64: 16, 128>}, {pipeline_mode = #tpu.pipeline_mode<synchronous>, transform_indices = @transform_2, window_bounds = array<i64: 1, 128>}, {transform_indices = @transform_3, window_bounds = array<i64: 16, 128>}, {transform_indices = @transform_4, window_bounds = array<i64: 16, 128>}]} {
    %c0 = arith.constant 0 : index
    %c0_0 = arith.constant 0 : index
    %0 = vector.load %arg1[%c0, %c0_0] : memref<16x128xf32, #tpu.memory_space<vmem>>, vector<16x128xf32>
    %c0_1 = arith.constant 0 : index
    %c0_2 = arith.constant 0 : index
    %1 = vector.load %arg2[%c0_1, %c0_2] : memref<16x128xf32, #tpu.memory_space<vmem>>, vector<16x128xf32>
    %c0_3 = arith.constant 0 : index
    %c0_4 = arith.constant 0 : index
    %2 = vector.load %arg3[%c0_3, %c0_4] : memref<1x128xf32, #tpu.memory_space<vmem>>, vector<1x128xf32>
    %3 = arith.mulf %0, %0 : vector<16x128xf32>
    %4 = arith.mulf %1, %1 : vector<16x128xf32>
    %5 = arith.addf %3, %4 : vector<16x128xf32>
    %6 = math.sqrt %5 : vector<16x128xf32>
    %cst = arith.constant 9.99999974E-6 : f32
    %7 = vector.broadcast %cst : f32 to vector<16x128xf32>
    %8 = arith.addf %6, %7 : vector<16x128xf32>
    %cst_5 = arith.constant 1.000000e+00 : f32
    %9 = vector.broadcast %cst_5 : f32 to vector<16x128xf32>
    %10 = arith.divf %9, %8 : vector<16x128xf32>
    %11 = vector.broadcast %2 : vector<1x128xf32> to vector<16x128xf32>
    %12 = arith.addf %6, %11 : vector<16x128xf32>
    %cst_6 = arith.constant 0.000000e+00 : f32
    %13 = vector.broadcast %cst_6 : f32 to vector<16x128xf32>
    %14 = arith.maximumf %12, %13 : vector<16x128xf32>
    %15 = arith.mulf %14, %10 : vector<16x128xf32>
    %16 = arith.mulf %15, %0 : vector<16x128xf32>
    %c0_7 = arith.constant 0 : index
    %c0_8 = arith.constant 0 : index
    %17 = vector.load %arg4[%c0_7, %c0_8] : memref<16x128xf32, #tpu.memory_space<vmem>>, vector<16x128xf32>
    tpu.vector_store %arg4[%c0_7, %c0_8], %16 {strides = array<i32>} : memref<16x128xf32, #tpu.memory_space<vmem>>, vector<16x128xf32>,
    %18 = arith.mulf %15, %1 : vector<16x128xf32>
    %c0_9 = arith.constant 0 : index
    %c0_10 = arith.constant 0 : index
    %19 = vector.load %arg5[%c0_9, %c0_10] : memref<16x128xf32, #tpu.memory_space<vmem>>, vector<16x128xf32>
    tpu.vector_store %arg5[%c0_9, %c0_10], %18 {strides = array<i32>} : memref<16x128xf32, #tpu.memory_space<vmem>>, vector<16x128xf32>,
    return
  }
  func.func @transform_0(%arg0: i32) -> (i32, i32) {
    %c0_i32 = arith.constant 0 : i32
    %c0_i32_0 = arith.constant 0 : i32
    return %arg0, %c0_i32 : i32, i32
  }
  func.func @transform_1(%arg0: i32) -> (i32, i32) {
    %c0_i32 = arith.constant 0 : i32
    %c0_i32_0 = arith.constant 0 : i32
    return %arg0, %c0_i32 : i32, i32
  }
  func.func @transform_2(%arg0: i32) -> (i32, i32) {
    %c0_i32 = arith.constant 0 : i32
    %c0_i32_0 = arith.constant 0 : i32
    %c0_i32_1 = arith.constant 0 : i32
    return %c0_i32, %c0_i32_0 : i32, i32
  }
  func.func @transform_3(%arg0: i32) -> (i32, i32) {
    %c0_i32 = arith.constant 0 : i32
    %c0_i32_0 = arith.constant 0 : i32
    return %arg0, %c0_i32 : i32, i32
  }
  func.func @transform_4(%arg0: i32) -> (i32, i32) {
    %c0_i32 = arith.constant 0 : i32
    %c0_i32_0 = arith.constant 0 : i32
    return %arg0, %c0_i32 : i32, i32
  }
}

</mosaic_0001>

<llo_original>
// kernel: tpu_custom_call.1
$region0: #{tpu_custom_call.1}
  #allocation0 [shape = 'u32[]', space=smem, size = 0x4, offset = 0x4, fixed_abs, tag = 'smem constant byte address 0x4 - core index']
  #allocation1 [shape = 'u32[144,128]{1,0:T(1,128)}', space=vmem, size = 0x12000, scoped, tag = 'internal scratch']
  %s0 = inlined_call_operand.hbm [shape: f32[16,128], index: 0, kind: input, shape index: {}]
  %s1 = inlined_call_operand.hbm [shape: f32[16,128], index: 1, kind: input, shape index: {}]
  %s2 = inlined_call_operand.vmem [shape: f32[1,128], index: 2, kind: input, shape index: {}]
  %s3 = inlined_call_operand.hbm [shape: f32[16,128], index: 3, kind: output, shape index: {0}]
  %s4 = inlined_call_operand.hbm [shape: f32[16,128], index: 4, kind: output, shape index: {1}]
  %5 = xla_tuple %s3, %s4
  %s6 = sld [smem:[#allocation0]]
  $region38: #{tpu_custom_call.1} parent=0
    _
  %s8 = ssub.s32 1, %s6
  %s9 = scalar_select 0, %s8, %s6
  $region1: #{tpu_custom_call.1} parent=0
    #allocation2 [shape = 'u8[8192]{0}', space=vmem, size = 0x2000, scoped, tag = 'input window, operand 0, single buffered']
    #allocation3 [shape = 's32[1]{0}', space=sflag, size = 0x4, scoped, tag = 'scoped memory for tpu_custom_call.1']
    #allocation4 [shape = 's32[1]{0}', space=sflag, size = 0x4, scoped, tag = 'scoped memory for tpu_custom_call.1']
    #allocation5 [shape = 'u8[8192]{0}', space=vmem, size = 0x2000, scoped, tag = 'input window, operand 1, single buffered']
    #allocation6 [shape = 's32[1]{0}', space=sflag, size = 0x4, scoped, tag = 'scoped memory for tpu_custom_call.1']
    #allocation7 [shape = 'u8[8192]{0}', space=vmem, size = 0x2000, scoped, tag = 'output window, operand 0, single buffered']
    #allocation8 [shape = 'u8[8192]{0}', space=vmem, size = 0x2000, scoped, tag = 'output window, operand 1, single buffered']
    #allocation9 [shape = 's32[1]{0}', space=sflag, size = 0x4, scoped, tag = 'scoped memory for tpu_custom_call.1']
    %10 = vsyncpa [#allocation3], 0
    %11 = vsyncpa [#allocation6], 0
    %12 = vsyncpa [#allocation4], 0
    %13 = vsyncpa [#allocation9], 0
    // Predicated region
    $region2: #{tpu_custom_call.1} parent=1 // pred_check
      _
    $region3: #{tpu_custom_call.1} parent=1 // pred_check_branch
      %15 = sbr.rel (0) target = $region5
    $region4: #{tpu_custom_call.1} parent=1 // pred_region
      %s17 = ssub.s32 256, 256
      %18 = vsyncadd [#allocation3], %s17
      %s19 = sshll.u32 [#allocation2], 4
      %s20 = int_to_ptr.vmem [resolvable:$true] %s19
      %25 = dma.hbm_to_vmem [thread:$0]  %s0, 256, %s20, [#allocation3], 128, 128, 8
    $region5: #{tpu_custom_call.1} parent=1 // pred_fallthru
      _
    // Predicated region
    $region6: #{tpu_custom_call.1} parent=1 // pred_check
      _
    $region7: #{tpu_custom_call.1} parent=1 // pred_check_branch
      %27 = sbr.rel (0) target = $region9
    $region8: #{tpu_custom_call.1} parent=1 // pred_region
      %s29 = ssub.s32 256, 256
      %30 = vsyncadd [#allocation6], %s29
      %s31 = sshll.u32 [#allocation5], 4
      %s32 = int_to_ptr.vmem [resolvable:$true] %s31
      %37 = dma.hbm_to_vmem [thread:$0]  %s1, 256, %s32, [#allocation6], 128, 128, 8
    $region9: #{tpu_custom_call.1} parent=1 // pred_fallthru
      _
    // Predicated region
    $region10: #{tpu_custom_call.1} parent=1 // pred_check
      _
    $region11: #{tpu_custom_call.1} parent=1 // pred_check_branch
      %39 = sbr.rel (0) target = $region13
    $region12: #{tpu_custom_call.1} parent=1 // pred_region
      _
    $region13: #{tpu_custom_call.1} parent=1 // pred_fallthru
      _
    // Predicated region
    $region14: #{tpu_custom_call.1} parent=1 // pred_check
      _
    $region15: #{tpu_custom_call.1} parent=1 // pred_check_branch
      %41 = sbr.rel (0) target = $region17
    $region16: #{tpu_custom_call.1} parent=1 // pred_region
      %42 = dma.done [#allocation3], 256
    $region17: #{tpu_custom_call.1} parent=1 // pred_fallthru
      _
    // Predicated region
    $region18: #{tpu_custom_call.1} parent=1 // pred_check
      _
    $region19: #{tpu_custom_call.1} parent=1 // pred_check_branch
      %44 = sbr.rel (0) target = $region21
    $region20: #{tpu_custom_call.1} parent=1 // pred_region
      %45 = dma.done [#allocation6], 256
    $region21: #{tpu_custom_call.1} parent=1 // pred_fallthru
      _
    %v46 = vld [vmem:[#allocation2] sm:$0xff]
    %v47 = vld [vmem:[#allocation2 + $0x8] sm:$0xff]
    %v48 = vld [vmem:[#allocation5] sm:$0xff]
    %v49 = vld [vmem:[#allocation5 + $0x8] sm:$0xff]
    %v50 = vld [vmem:[%s2] sm:$0x1]
    %v51 = vmul.f32 %v46, %v46
    %v52 = vmul.f32 %v47, %v47
    %v53 = vmul.f32 %v48, %v48
    %v54 = vmul.f32 %v49, %v49
    %v55 = vadd.f32 %v51, %v53
    %v56 = vadd.f32 %v52, %v54
    %v57 = vrsqrt.pop %v55
    %v58 = vmul.f32 %v55, %v57
    %vm59 = vcmp.eq.f32.partialorder %v55, inf
    %v60 = vsel %vm59, %v55, %v58
    %vm61 = vcmp.eq.f32.partialorder %v55, 0.0
    %v62 = vand.u32 %v55, 2147483648
    %v63 = vsel %vm61, %v62, %v60
    %v64 = vrsqrt.pop %v56
    %v65 = vmul.f32 %v56, %v64
    %vm66 = vcmp.eq.f32.partialorder %v56, inf
    %v67 = vsel %vm66, %v56, %v65
    %vm68 = vcmp.eq.f32.partialorder %v56, 0.0
    %v69 = vand.u32 %v56, 2147483648
    %v70 = vsel %vm68, %v69, %v67
    %v71 = vadd.f32 %v63, 1e-05
    %v72 = vadd.f32 %v70, 1e-05
    %v73 = vrcp.pop %v71
    %v74 = vmul.f32 1.0, %v73
    %v75 = vrcp.pop %v72
    %v76 = vmul.f32 1.0, %v75
    %v78 = vlaneseq
    %v79 = vshrl.u32 %v78, 7
    %v80 = vsub.s32 0, %v79
    %v81 = vrot.slane %v50, %v80
    %v83 = vadd.f32 %v63, %v81
    %v84 = vadd.f32 %v70, %v81
    %v85 = vmax.f32 %v83, 0.0
    %v86 = vmax.f32 %v84, 0.0
    %v87 = vmul.f32 %v85, %v74
    %v88 = vmul.f32 %v86, %v76
    %v89 = vmul.f32 %v87, %v46
    %v90 = vmul.f32 %v88, %v47
    %91 = vst [vmem:[#allocation7] sm:$0xff] %v89
    %92 = vst [vmem:[#allocation7 + $0x8] sm:$0xff] %v90
    %v93 = vmul.f32 %v87, %v48
    %v94 = vmul.f32 %v88, %v49
    %95 = vst [vmem:[#allocation8] sm:$0xff] %v93
    %96 = vst [vmem:[#allocation8 + $0x8] sm:$0xff] %v94
    // Predicated region
    $region22: #{tpu_custom_call.1} parent=1 // pred_check
      _
    $region23: #{tpu_custom_call.1} parent=1 // pred_check_branch
      %98 = sbr.rel (0) target = $region25
    $region24: #{tpu_custom_call.1} parent=1 // pred_region
      %s100 = ssub.s32 256, 256
      %101 = vsyncadd [#allocation4], %s100
      %s102 = sshll.u32 [#allocation7], 4
      %s103 = int_to_ptr.vmem [resolvable:$true] %s102
      %108 = dma.vmem_to_hbm [thread:$0]  %s103, 256, %s3, [#allocation4], 128, 128, 8
    $region25: #{tpu_custom_call.1} parent=1 // pred_fallthru
      _
    // Predicated region
    $region26: #{tpu_custom_call.1} parent=1 // pred_check
      _
    $region27: #{tpu_custom_call.1} parent=1 // pred_check_branch
      %110 = sbr.rel (0) target = $region29
    $region28: #{tpu_custom_call.1} parent=1 // pred_region
      %s112 = ssub.s32 256, 256
      %113 = vsyncadd [#allocation9], %s112
      %s114 = sshll.u32 [#allocation8], 4
      %s115 = int_to_ptr.vmem [resolvable:$true] %s114
      %120 = dma.vmem_to_hbm [thread:$0]  %s115, 256, %s4, [#allocation9], 128, 128, 8
    $region29: #{tpu_custom_call.1} parent=1 // pred_fallthru
      _
    // Predicated region
    $region30: #{tpu_custom_call.1} parent=1 // pred_check
      _
    $region31: #{tpu_custom_call.1} parent=1 // pred_check_branch
      %122 = sbr.rel (0) target = $region33
    $region32: #{tpu_custom_call.1} parent=1 // pred_region
      %123 = dma.done [#allocation4], 256
    $region33: #{tpu_custom_call.1} parent=1 // pred_fallthru
      _
    // Predicated region
    $region34: #{tpu_custom_call.1} parent=1 // pred_check
      _
    $region35: #{tpu_custom_call.1} parent=1 // pred_check_branch
      %125 = sbr.rel (0) target = $region37
    $region36: #{tpu_custom_call.1} parent=1 // pred_region
      %126 = dma.done [#allocation9], 256
    $region37: #{tpu_custom_call.1} parent=1 // pred_fallthru
      _
    %127 = vsyncpa [#allocation3], 1
    %128 = vsyncpa [#allocation6], 1
    %129 = vsyncpa [#allocation4], 1
    %130 = vsyncpa [#allocation9], 1

</llo_original>
